<compile_context>
chip_gen: v6e
topology: v6e:2x2x1
jax: 0.10.0
libtpu: 0.0.40
codegen_flags: <defaults>
</compile_context>

<pallas_src>
import functools

import jax
import jax.numpy as jnp
from jax import lax
from jax.experimental import pallas as pl
from jax.experimental.pallas import tpu as pltpu


# ----------------------------------------------------------------------------
# Pallas kernel: whole batch in one step, channels on sublanes, (n,h,w) on lanes.
# ----------------------------------------------------------------------------
def _resblock_kernel(x_ref, m_ref, w1f_ref, w2f_ref, o_ref, *, Cout, W, NHW):
    # x_ref  : (Cin_p, NHW)         input (channel rows padded to 8), f32
    # m_ref  : (9, NHW)             per-tap validity masks (1 inside image)
    # w1f_ref: (2*Cout, 9*Cin_p+1)  [conv1*s1 ; centre-tap 1x1*s1d], last col = shifts
    # w2f_ref: (Cout, 9*Cout+1)     conv2*s2, last col = shift
    # o_ref  : (Cout, NHW)          pooled-pairs output (even-h lanes valid)
    x = x_ref[...]
    ones = jnp.ones((1, NHW), jnp.float32)   # bias/shift row for the matmuls

    def im2col(a):
        # (rows, NHW) -> (9*rows + 1, NHW); tap k = (dy*3+dx) is `a` shifted by
        # (dy-1)*W + (dx-1) along the flat (n,h,w) lane axis, zeroed outside
        # the image (the masks also kill any roll wrap-around / cross-image
        # leakage).  All slabs stay lane-dense.
        pieces = []
        for k in range(9):
            dy, dx = divmod(k, 3)
            off = (dy - 1) * W + (dx - 1)
            t = a if off == 0 else jnp.roll(a, -off, axis=1)
            if k != 4:                       # centre tap never leaves the image
                t = t * m_ref[k:k + 1, :]
            pieces.append(t)
        pieces.append(ones)
        return jnp.concatenate(pieces, axis=0)

    # ---- conv1 + bn1 (+shift) fused with the residual 1x1 conv + bn1d ------
    cols1 = im2col(x)                                         # (9*Cin_p+1, NHW)
    acc1 = jnp.dot(w1f_ref[...], cols1,
                   preferred_element_type=jnp.float32)        # (2*Cout, NHW)
    h1 = jnp.maximum(acc1[:Cout, :], 0.0)                     # relu(bn1(conv1))
    res = acc1[Cout:, :]                                      # bn1d(conv1x1)
    # TODO(synk): dropout is identity here (eval-mode semantics); training-mode
    # dropout would use pltpu.prng_seed / pltpu.prng_random_bits.

    # ---- conv2 + bn2 (+shift) + relu ---------------------------------------
    cols2 = im2col(h1)                                        # (9*Cout+1, NHW)
    acc2 = jnp.dot(w2f_ref[...], cols2,
                   preferred_element_type=jnp.float32)        # (Cout, NHW)
    h2 = jnp.maximum(acc2, 0.0)

    # ---- residual add + AvgPool2d((2,1)) over H -----------------------------
    y = h2 + res
    y_next = jnp.roll(y, -W, axis=1)        # partner row (h+1) is W lanes ahead
    # Even-h lanes hold the pooled value; odd-h lanes hold junk the wrapper
    # drops.  Storing the full slab keeps the store lane-dense (unmasked vst).
    o_ref[...] = ((y + y_next) * 0.5).astype(o_ref.dtype)


# ----------------------------------------------------------------------------
# Wrapper: layout conversion, BN/weight folding, pallas_call plumbing.
# ----------------------------------------------------------------------------
def resblock_forward(x_nchw, params):
    N, Cin, H, W = x_nchw.shape
    Cout = params["w1"].shape[0]
    assert H % 2 == 0, "AvgPool2d((2,1)) needs even H"
    NHW = N * H * W
    Cin_p = ((Cin + 7) // 8) * 8             # pad channels to a sublane multiple

    # NCHW -> (Cin_p, N*H*W): channels on sublanes, flattened (n,h,w) on lanes.
    x2d = jnp.transpose(x_nchw.astype(jnp.float32), (1, 0, 2, 3)).reshape(Cin, NHW)
    x2d = jnp.pad(x2d, ((0, Cin_p - Cin), (0, 0)))

    # Per-tap halo masks over the flattened (n,h,w) axis (same for every image).
    hh = jnp.arange(H)[:, None]
    ww = jnp.arange(W)[None, :]
    mask_rows = []
    for dy in range(3):
        for dx in range(3):
            m = ((hh + dy - 1 >= 0) & (hh + dy - 1 < H) &
                 (ww + dx - 1 >= 0) & (ww + dx - 1 < W))
            mask_rows.append(jnp.tile(m.astype(jnp.float32).reshape(-1), N))
    masks = jnp.stack(mask_rows, axis=0)                       # (9, NHW)

    # Fold conv bias + eval-mode BatchNorm into per-channel (scale, shift).
    def fold(bias, bn, eps=1e-5):
        gamma, beta, mean, var = bn
        scale = (gamma / jnp.sqrt(var + eps)).astype(jnp.float32)
        shift = (beta + scale * (bias - mean)).astype(jnp.float32)
        return scale, shift

    s1, sh1 = fold(params["b1"], params["bn1"])
    s2, sh2 = fold(params["b2"], params["bn2"])
    s1d, sh1d = fold(params["b1d"], params["bn1d"])

    # conv1: OIHW -> (Cout, 3, 3, Cin_p) -> (Cout, 9*Cin_p), bn1 scale folded.
    w1 = jnp.transpose(params["w1"].astype(jnp.float32), (0, 2, 3, 1))
    w1 = jnp.pad(w1, ((0, 0), (0, 0), (0, 0), (0, Cin_p - Cin)))
    w1 = w1.reshape(Cout, 9 * Cin_p) * s1[:, None]

    # Residual 1x1 conv expanded onto the centre tap (dy=dx=1 -> tap index 4).
    w1d = params["w1d"][:, :, 0, 0].astype(jnp.float32) * s1d[:, None]   # (Cout, Cin)
    w1d_exp = jnp.zeros((Cout, 9 * Cin_p), jnp.float32)
    w1d_exp = w1d_exp.at[:, 4 * Cin_p:4 * Cin_p + Cin].set(w1d)

    # Fuse conv1 + residual along the output-row (sublane) axis; append the
    # per-channel shift as an extra K column multiplying the in-kernel ones row.
    w1f = jnp.concatenate([w1, w1d_exp], axis=0)                         # (2*Cout, 9*Cin_p)
    w1f = jnp.concatenate([w1f, jnp.concatenate([sh1, sh1d])[:, None]], axis=1)

    # conv2: OIHW -> (Cout, 9*Cout), bn2 scale folded, shift column appended.
    w2 = jnp.transpose(params["w2"].astype(jnp.float32), (0, 2, 3, 1))
    w2 = w2.reshape(Cout, 9 * Cout) * s2[:, None]
    w2f = jnp.concatenate([w2, sh2[:, None]], axis=1)                    # (Cout, 9*Cout+1)

    kernel = functools.partial(_resblock_kernel, Cout=Cout, W=W, NHW=NHW)

    out2d = pl.pallas_call(
        kernel,
        out_shape=jax.ShapeDtypeStruct((Cout, NHW), jnp.float32),
        grid_spec=pltpu.PrefetchScalarGridSpec(
            num_scalar_prefetch=0,
            grid=(1,),                      # whole batch in one step (N is tiny)
            in_specs=[
                pl.BlockSpec((Cin_p, NHW), lambda i: (0, 0)),
                pl.BlockSpec((9, NHW), lambda i: (0, 0)),
                pl.BlockSpec((2 * Cout, 9 * Cin_p + 1), lambda i: (0, 0)),
                pl.BlockSpec((Cout, 9 * Cout + 1), lambda i: (0, 0)),
            ],
            out_specs=pl.BlockSpec((Cout, NHW), lambda i: (0, 0)),
        ),
        compiler_params=pltpu.CompilerParams(dimension_semantics=("arbitrary",)),
    )(x2d, masks, w1f, w2f)

    # Drop the junk odd-h lanes (pure layout plumbing), back to NCHW.
    out = out2d.reshape(Cout, N, H // 2, 2, W)[:, :, :, 0, :]   # (Cout, N, H/2, W)
    return jnp.transpose(out, (1, 0, 2, 3))                     # (N, Cout, H/2, W)


# ----------------------------------------------------------------------------
# Plain-JAX reference (independent path via lax.conv) for a sanity check.
# ----------------------------------------------------------------------------
def resblock_reference(x_nchw, params):
    x = jnp.transpose(x_nchw, (0, 2, 3, 1)).astype(jnp.float32)

    def conv(inp, w_oihw, b, pad):
        w = jnp.transpose(w_oihw, (2, 3, 1, 0)).astype(jnp.float32)
        y = lax.conv_general_dilated(
            inp, w, (1, 1), [(pad, pad), (pad, pad)],
            dimension_numbers=("NHWC", "HWIO", "NHWC"))
        return y + b

    def bn(inp, stats, eps=1e-5):
        gamma, beta, mean, var = stats
        return (inp - mean) * gamma / jnp.sqrt(var + eps) + beta

    x_res = bn(conv(x, params["w1d"], params["b1d"], 0), params["bn1d"])
    h = jax.nn.relu(bn(conv(x, params["w1"], params["b1"], 1), params["bn1"]))
    h = jax.nn.relu(bn(conv(h, params["w2"], params["b2"], 1), params["bn2"]))
    y = h + x_res
    N, H, W, C = y.shape
    y = y.reshape(N, H // 2, 2, W, C).mean(axis=2)
    return jnp.transpose(y, (0, 3, 1, 2))


# ----------------------------------------------------------------------------
# Main
# ----------------------------------------------------------------------------
if __name__ == "__main__":
    N, Cin, Cout, H, W = 2, 4, 8, 16, 16

    key = jax.random.PRNGKey(0)
    ks = jax.random.split(key, 16)

    def bn_params(k):
        k1, k2, k3, k4 = jax.random.split(k, 4)
        gamma = jax.random.uniform(k1, (Cout,), jnp.float32, 0.5, 1.5)
        beta = 0.1 * jax.random.normal(k2, (Cout,), jnp.float32)
        mean = 0.1 * jax.random.normal(k3, (Cout,), jnp.float32)
        var = jax.random.uniform(k4, (Cout,), jnp.float32, 0.5, 1.5)
        return (gamma, beta, mean, var)

    params = {
        "w1": 0.2 * jax.random.normal(ks[0], (Cout, Cin, 3, 3), jnp.float32),
        "b1": 0.1 * jax.random.normal(ks[1], (Cout,), jnp.float32),
        "bn1": bn_params(ks[2]),
        "w2": 0.2 * jax.random.normal(ks[3], (Cout, Cout, 3, 3), jnp.float32),
        "b2": 0.1 * jax.random.normal(ks[4], (Cout,), jnp.float32),
        "bn2": bn_params(ks[5]),
        "w1d": 0.2 * jax.random.normal(ks[6], (Cout, Cin, 1, 1), jnp.float32),
        "b1d": 0.1 * jax.random.normal(ks[7], (Cout,), jnp.float32),
        "bn1d": bn_params(ks[8]),
    }

    x = jax.random.normal(ks[9], (N, Cin, H, W), jnp.float32)

    out = jax.block_until_ready(resblock_forward(x, params))
    ref = jax.block_until_ready(resblock_reference(x, params))

    assert out.shape == (N, Cout, H // 2, W), out.shape
    assert jnp.allclose(out, ref, rtol=1e-3, atol=1e-3), (
        float(jnp.max(jnp.abs(out - ref))))

    print("KERNEL_OK")
</pallas_src>

<mosaic_0001>
module attributes {stable_mosaic.version = 11 : i64} {
  func.func @_resblock_kernel(%arg0: i32, %arg1: memref<8x512xf32, #tpu.memory_space<vmem>>, %arg2: memref<9x512xf32, #tpu.memory_space<vmem>>, %arg3: memref<16x73xf32, #tpu.memory_space<vmem>>, %arg4: memref<8x73xf32, #tpu.memory_space<vmem>>, %arg5: memref<8x512xf32, #tpu.memory_space<vmem>>) attributes {dimension_semantics = [#tpu.dimension_semantics<arbitrary>], iteration_bounds = array<i64: 1>, scalar_prefetch = 0 : i64, scratch_operands = 0 : i64, tpu.core_type = #tpu.core_type<tc>, window_params = [{pipeline_mode = #tpu.pipeline_mode<synchronous>, transform_indices = @transform_0, window_bounds = array<i64: 8, 512>}, {pipeline_mode = #tpu.pipeline_mode<synchronous>, transform_indices = @transform_1, window_bounds = array<i64: 9, 512>}, {pipeline_mode = #tpu.pipeline_mode<synchronous>, transform_indices = @transform_2, window_bounds = array<i64: 16, 73>}, {pipeline_mode = #tpu.pipeline_mode<synchronous>, transform_indices = @transform_3, window_bounds = array<i64: 8, 73>}, {pipeline_mode = #tpu.pipeline_mode<synchronous>, transform_indices = @transform_4, window_bounds = array<i64: 8, 512>}]} {
    %c0 = arith.constant 0 : index
    %c0_0 = arith.constant 0 : index
    %0 = vector.load %arg1[%c0, %c0_0] : memref<8x512xf32, #tpu.memory_space<vmem>>, vector<8x512xf32>
    %cst = arith.constant 1.000000e+00 : f32
    %1 = vector.broadcast %cst : f32 to vector<1x512xf32>
    %2 = vector.extract_strided_slice %0 {offsets = [0, 495], sizes = [8, 17], strides = [1, 1]} : vector<8x512xf32> to vector<8x17xf32>
    %3 = vector.extract_strided_slice %0 {offsets = [0, 0], sizes = [8, 495], strides = [1, 1]} : vector<8x512xf32> to vector<8x495xf32>
    %4 = tpu.concatenate %2, %3 in 1 : vector<8x17xf32>, vector<8x495xf32> -> vector<8x512xf32>
    %c0_1 = arith.constant 0 : index
    %c0_2 = arith.constant 0 : index
    %5 = vector.load %arg2[%c0_1, %c0_2] : memref<9x512xf32, #tpu.memory_space<vmem>>, vector<1x512xf32>
    %6 = vector.broadcast %5 : vector<1x512xf32> to vector<8x512xf32>
    %7 = arith.mulf %4, %6 : vector<8x512xf32>
    %8 = vector.extract_strided_slice %0 {offsets = [0, 496], sizes = [8, 16], strides = [1, 1]} : vector<8x512xf32> to vector<8x16xf32>
    %9 = vector.extract_strided_slice %0 {offsets = [0, 0], sizes = [8, 496], strides = [1, 1]} : vector<8x512xf32> to vector<8x496xf32>
    %10 = tpu.concatenate %8, %9 in 1 : vector<8x16xf32>, vector<8x496xf32> -> vector<8x512xf32>
    %c1 = arith.constant 1 : index
    %c0_3 = arith.constant 0 : index
    %11 = vector.load %arg2[%c1, %c0_3] : memref<9x512xf32, #tpu.memory_space<vmem>>, vector<1x512xf32>
    %12 = vector.broadcast %11 : vector<1x512xf32> to vector<8x512xf32>
    %13 = arith.mulf %10, %12 : vector<8x512xf32>
    %14 = vector.extract_strided_slice %0 {offsets = [0, 497], sizes = [8, 15], strides = [1, 1]} : vector<8x512xf32> to vector<8x15xf32>
    %15 = vector.extract_strided_slice %0 {offsets = [0, 0], sizes = [8, 497], strides = [1, 1]} : vector<8x512xf32> to vector<8x497xf32>
    %16 = tpu.concatenate %14, %15 in 1 : vector<8x15xf32>, vector<8x497xf32> -> vector<8x512xf32>
    %c2 = arith.constant 2 : index
    %c0_4 = arith.constant 0 : index
    %17 = vector.load %arg2[%c2, %c0_4] : memref<9x512xf32, #tpu.memory_space<vmem>>, vector<1x512xf32>
    %18 = vector.broadcast %17 : vector<1x512xf32> to vector<8x512xf32>
    %19 = arith.mulf %16, %18 : vector<8x512xf32>
    %20 = vector.extract_strided_slice %0 {offsets = [0, 511], sizes = [8, 1], strides = [1, 1]} : vector<8x512xf32> to vector<8x1xf32>
    %21 = vector.extract_strided_slice %0 {offsets = [0, 0], sizes = [8, 511], strides = [1, 1]} : vector<8x512xf32> to vector<8x511xf32>
    %22 = tpu.concatenate %20, %21 in 1 : vector<8x1xf32>, vector<8x511xf32> -> vector<8x512xf32>
    %c3 = arith.constant 3 : index
    %c0_5 = arith.constant 0 : index
    %23 = vector.load %arg2[%c3, %c0_5] : memref<9x512xf32, #tpu.memory_space<vmem>>, vector<1x512xf32>
    %24 = vector.broadcast %23 : vector<1x512xf32> to vector<8x512xf32>
    %25 = arith.mulf %22, %24 : vector<8x512xf32>
    %26 = vector.extract_strided_slice %0 {offsets = [0, 1], sizes = [8, 511], strides = [1, 1]} : vector<8x512xf32> to vector<8x511xf32>
    %27 = vector.extract_strided_slice %0 {offsets = [0, 0], sizes = [8, 1], strides = [1, 1]} : vector<8x512xf32> to vector<8x1xf32>
    %28 = tpu.concatenate %26, %27 in 1 : vector<8x511xf32>, vector<8x1xf32> -> vector<8x512xf32>
    %c5 = arith.constant 5 : index
    %c0_6 = arith.constant 0 : index
    %29 = vector.load %arg2[%c5, %c0_6] : memref<9x512xf32, #tpu.memory_space<vmem>>, vector<1x512xf32>
    %30 = vector.broadcast %29 : vector<1x512xf32> to vector<8x512xf32>
    %31 = arith.mulf %28, %30 : vector<8x512xf32>
    %32 = vector.extract_strided_slice %0 {offsets = [0, 15], sizes = [8, 497], strides = [1, 1]} : vector<8x512xf32> to vector<8x497xf32>
    %33 = vector.extract_strided_slice %0 {offsets = [0, 0], sizes = [8, 15], strides = [1, 1]} : vector<8x512xf32> to vector<8x15xf32>
    %34 = tpu.concatenate %32, %33 in 1 : vector<8x497xf32>, vector<8x15xf32> -> vector<8x512xf32>
    %c6 = arith.constant 6 : index
    %c0_7 = arith.constant 0 : index
    %35 = vector.load %arg2[%c6, %c0_7] : memref<9x512xf32, #tpu.memory_space<vmem>>, vector<1x512xf32>
    %36 = vector.broadcast %35 : vector<1x512xf32> to vector<8x512xf32>
    %37 = arith.mulf %34, %36 : vector<8x512xf32>
    %38 = vector.extract_strided_slice %0 {offsets = [0, 16], sizes = [8, 496], strides = [1, 1]} : vector<8x512xf32> to vector<8x496xf32>
    %39 = vector.extract_strided_slice %0 {offsets = [0, 0], sizes = [8, 16], strides = [1, 1]} : vector<8x512xf32> to vector<8x16xf32>
    %40 = tpu.concatenate %38, %39 in 1 : vector<8x496xf32>, vector<8x16xf32> -> vector<8x512xf32>
    %c7 = arith.constant 7 : index
    %c0_8 = arith.constant 0 : index
    %41 = vector.load %arg2[%c7, %c0_8] : memref<9x512xf32, #tpu.memory_space<vmem>>, vector<1x512xf32>
    %42 = vector.broadcast %41 : vector<1x512xf32> to vector<8x512xf32>
    %43 = arith.mulf %40, %42 : vector<8x512xf32>
    %44 = vector.extract_strided_slice %0 {offsets = [0, 17], sizes = [8, 495], strides = [1, 1]} : vector<8x512xf32> to vector<8x495xf32>
    %45 = vector.extract_strided_slice %0 {offsets = [0, 0], sizes = [8, 17], strides = [1, 1]} : vector<8x512xf32> to vector<8x17xf32>
    %46 = tpu.concatenate %44, %45 in 1 : vector<8x495xf32>, vector<8x17xf32> -> vector<8x512xf32>
    %c8 = arith.constant 8 : index
    %c0_9 = arith.constant 0 : index
    %47 = vector.load %arg2[%c8, %c0_9] : memref<9x512xf32, #tpu.memory_space<vmem>>, vector<1x512xf32>
    %48 = vector.broadcast %47 : vector<1x512xf32> to vector<8x512xf32>
    %49 = arith.mulf %46, %48 : vector<8x512xf32>
    %50 = tpu.concatenate %7, %13, %19, %25, %0, %31, %37, %43, %49, %1 in 0 : vector<8x512xf32>, vector<8x512xf32>, vector<8x512xf32>, vector<8x512xf32>, vector<8x512xf32>, vector<8x512xf32>, vector<8x512xf32>, vector<8x512xf32>, vector<8x512xf32>, vector<1x512xf32> -> vector<73x512xf32>
    %c0_10 = arith.constant 0 : index
    %c0_11 = arith.constant 0 : index
    %51 = vector.load %arg3[%c0_10, %c0_11] : memref<16x73xf32, #tpu.memory_space<vmem>>, vector<16x73xf32>
    %cst_12 = arith.constant dense<0.000000e+00> : vector<16x512xf32>
    %52 = tpu.matmul %51, %50, %cst_12 {dimension_numbers = #tpu.dot_dimension_numbers<[1], [0], [0], [1], [0, 0, 1, 1], [], []>} : vector<16x73xf32>, vector<73x512xf32>, vector<16x512xf32> -> vector<16x512xf32>
    %53 = vector.extract_strided_slice %52 {offsets = [0, 0], sizes = [8, 512], strides = [1, 1]} : vector<16x512xf32> to vector<8x512xf32>
    %cst_13 = arith.constant 0.000000e+00 : f32
    %54 = vector.broadcast %cst_13 : f32 to vector<8x512xf32>
    %55 = arith.maximumf %53, %54 : vector<8x512xf32>
    %56 = vector.extract_strided_slice %52 {offsets = [8, 0], sizes = [8, 512], strides = [1, 1]} : vector<16x512xf32> to vector<8x512xf32>
    %57 = vector.extract_strided_slice %55 {offsets = [0, 495], sizes = [8, 17], strides = [1, 1]} : vector<8x512xf32> to vector<8x17xf32>
    %58 = vector.extract_strided_slice %55 {offsets = [0, 0], sizes = [8, 495], strides = [1, 1]} : vector<8x512xf32> to vector<8x495xf32>
    %59 = tpu.concatenate %57, %58 in 1 : vector<8x17xf32>, vector<8x495xf32> -> vector<8x512xf32>
    %c0_14 = arith.constant 0 : index
    %c0_15 = arith.constant 0 : index
    %60 = vector.load %arg2[%c0_14, %c0_15] : memref<9x512xf32, #tpu.memory_space<vmem>>, vector<1x512xf32>
    %61 = vector.broadcast %60 : vector<1x512xf32> to vector<8x512xf32>
    %62 = arith.mulf %59, %61 : vector<8x512xf32>
    %63 = vector.extract_strided_slice %55 {offsets = [0, 496], sizes = [8, 16], strides = [1, 1]} : vector<8x512xf32> to vector<8x16xf32>
    %64 = vector.extract_strided_slice %55 {offsets = [0, 0], sizes = [8, 496], strides = [1, 1]} : vector<8x512xf32> to vector<8x496xf32>
    %65 = tpu.concatenate %63, %64 in 1 : vector<8x16xf32>, vector<8x496xf32> -> vector<8x512xf32>
    %c1_16 = arith.constant 1 : index
    %c0_17 = arith.constant 0 : index
    %66 = vector.load %arg2[%c1_16, %c0_17] : memref<9x512xf32, #tpu.memory_space<vmem>>, vector<1x512xf32>
    %67 = vector.broadcast %66 : vector<1x512xf32> to vector<8x512xf32>
    %68 = arith.mulf %65, %67 : vector<8x512xf32>
    %69 = vector.extract_strided_slice %55 {offsets = [0, 497], sizes = [8, 15], strides = [1, 1]} : vector<8x512xf32> to vector<8x15xf32>
    %70 = vector.extract_strided_slice %55 {offsets = [0, 0], sizes = [8, 497], strides = [1, 1]} : vector<8x512xf32> to vector<8x497xf32>
    %71 = tpu.concatenate %69, %70 in 1 : vector<8x15xf32>, vector<8x497xf32> -> vector<8x512xf32>
    %c2_18 = arith.constant 2 : index
    %c0_19 = arith.constant 0 : index
    %72 = vector.load %arg2[%c2_18, %c0_19] : memref<9x512xf32, #tpu.memory_space<vmem>>, vector<1x512xf32>
    %73 = vector.broadcast %72 : vector<1x512xf32> to vector<8x512xf32>
    %74 = arith.mulf %71, %73 : vector<8x512xf32>
    %75 = vector.extract_strided_slice %55 {offsets = [0, 511], sizes = [8, 1], strides = [1, 1]} : vector<8x512xf32> to vector<8x1xf32>
    %76 = vector.extract_strided_slice %55 {offsets = [0, 0], sizes = [8, 511], strides = [1, 1]} : vector<8x512xf32> to vector<8x511xf32>
    %77 = tpu.concatenate %75, %76 in 1 : vector<8x1xf32>, vector<8x511xf32> -> vector<8x512xf32>
    %c3_20 = arith.constant 3 : index
    %c0_21 = arith.constant 0 : index
    %78 = vector.load %arg2[%c3_20, %c0_21] : memref<9x512xf32, #tpu.memory_space<vmem>>, vector<1x512xf32>
    %79 = vector.broadcast %78 : vector<1x512xf32> to vector<8x512xf32>
    %80 = arith.mulf %77, %79 : vector<8x512xf32>
    %81 = vector.extract_strided_slice %55 {offsets = [0, 1], sizes = [8, 511], strides = [1, 1]} : vector<8x512xf32> to vector<8x511xf32>
    %82 = vector.extract_strided_slice %55 {offsets = [0, 0], sizes = [8, 1], strides = [1, 1]} : vector<8x512xf32> to vector<8x1xf32>
    %83 = tpu.concatenate %81, %82 in 1 : vector<8x511xf32>, vector<8x1xf32> -> vector<8x512xf32>
    %c5_22 = arith.constant 5 : index
    %c0_23 = arith.constant 0 : index
    %84 = vector.load %arg2[%c5_22, %c0_23] : memref<9x512xf32, #tpu.memory_space<vmem>>, vector<1x512xf32>
    %85 = vector.broadcast %84 : vector<1x512xf32> to vector<8x512xf32>
    %86 = arith.mulf %83, %85 : vector<8x512xf32>
    %87 = vector.extract_strided_slice %55 {offsets = [0, 15], sizes = [8, 497], strides = [1, 1]} : vector<8x512xf32> to vector<8x497xf32>
    %88 = vector.extract_strided_slice %55 {offsets = [0, 0], sizes = [8, 15], strides = [1, 1]} : vector<8x512xf32> to vector<8x15xf32>
    %89 = tpu.concatenate %87, %88 in 1 : vector<8x497xf32>, vector<8x15xf32> -> vector<8x512xf32>
    %c6_24 = arith.constant 6 : index
    %c0_25 = arith.constant 0 : index
    %90 = vector.load %arg2[%c6_24, %c0_25] : memref<9x512xf32, #tpu.memory_space<vmem>>, vector<1x512xf32>
    %91 = vector.broadcast %90 : vector<1x512xf32> to vector<8x512xf32>
    %92 = arith.mulf %89, %91 : vector<8x512xf32>
    %93 = vector.extract_strided_slice %55 {offsets = [0, 16], sizes = [8, 496], strides = [1, 1]} : vector<8x512xf32> to vector<8x496xf32>
    %94 = vector.extract_strided_slice %55 {offsets = [0, 0], sizes = [8, 16], strides = [1, 1]} : vector<8x512xf32> to vector<8x16xf32>
    %95 = tpu.concatenate %93, %94 in 1 : vector<8x496xf32>, vector<8x16xf32> -> vector<8x512xf32>
    %c7_26 = arith.constant 7 : index
    %c0_27 = arith.constant 0 : index
    %96 = vector.load %arg2[%c7_26, %c0_27] : memref<9x512xf32, #tpu.memory_space<vmem>>, vector<1x512xf32>
    %97 = vector.broadcast %96 : vector<1x512xf32> to vector<8x512xf32>
    %98 = arith.mulf %95, %97 : vector<8x512xf32>
    %99 = vector.extract_strided_slice %55 {offsets = [0, 17], sizes = [8, 495], strides = [1, 1]} : vector<8x512xf32> to vector<8x495xf32>
    %100 = vector.extract_strided_slice %55 {offsets = [0, 0], sizes = [8, 17], strides = [1, 1]} : vector<8x512xf32> to vector<8x17xf32>
    %101 = tpu.concatenate %99, %100 in 1 : vector<8x495xf32>, vector<8x17xf32> -> vector<8x512xf32>
    %c8_28 = arith.constant 8 : index
    %c0_29 = arith.constant 0 : index
    %102 = vector.load %arg2[%c8_28, %c0_29] : memref<9x512xf32, #tpu.memory_space<vmem>>, vector<1x512xf32>
    %103 = vector.broadcast %102 : vector<1x512xf32> to vector<8x512xf32>
    %104 = arith.mulf %101, %103 : vector<8x512xf32>
    %105 = tpu.concatenate %62, %68, %74, %80, %55, %86, %92, %98, %104, %1 in 0 : vector<8x512xf32>, vector<8x512xf32>, vector<8x512xf32>, vector<8x512xf32>, vector<8x512xf32>, vector<8x512xf32>, vector<8x512xf32>, vector<8x512xf32>, vector<8x512xf32>, vector<1x512xf32> -> vector<73x512xf32>
    %c0_30 = arith.constant 0 : index
    %c0_31 = arith.constant 0 : index
    %106 = vector.load %arg4[%c0_30, %c0_31] : memref<8x73xf32, #tpu.memory_space<vmem>>, vector<8x73xf32>
    %cst_32 = arith.constant dense<0.000000e+00> : vector<8x512xf32>
    %107 = tpu.matmul %106, %105, %cst_32 {dimension_numbers = #tpu.dot_dimension_numbers<[1], [0], [0], [1], [0, 0, 1, 1], [], []>} : vector<8x73xf32>, vector<73x512xf32>, vector<8x512xf32> -> vector<8x512xf32>
    %cst_33 = arith.constant 0.000000e+00 : f32
    %108 = vector.broadcast %cst_33 : f32 to vector<8x512xf32>
    %109 = arith.maximumf %107, %108 : vector<8x512xf32>
    %110 = arith.addf %109, %56 : vector<8x512xf32>
    %111 = vector.extract_strided_slice %110 {offsets = [0, 16], sizes = [8, 496], strides = [1, 1]} : vector<8x512xf32> to vector<8x496xf32>
    %112 = vector.extract_strided_slice %110 {offsets = [0, 0], sizes = [8, 16], strides = [1, 1]} : vector<8x512xf32> to vector<8x16xf32>
    %113 = tpu.concatenate %111, %112 in 1 : vector<8x496xf32>, vector<8x16xf32> -> vector<8x512xf32>
    %114 = arith.addf %110, %113 : vector<8x512xf32>
    %cst_34 = arith.constant 5.000000e-01 : f32
    %115 = vector.broadcast %cst_34 : f32 to vector<8x512xf32>
    %116 = arith.mulf %114, %115 : vector<8x512xf32>
    %c0_35 = arith.constant 0 : index
    %c0_36 = arith.constant 0 : index
    %117 = vector.load %arg5[%c0_35, %c0_36] : memref<8x512xf32, #tpu.memory_space<vmem>>, vector<8x512xf32>
    tpu.vector_store %arg5[%c0_35, %c0_36], %116 {strides = array<i32>} : memref<8x512xf32, #tpu.memory_space<vmem>>, vector<8x512xf32>,
    return
  }
  func.func @transform_0(%arg0: i32) -> (i32, i32) {
    %c0_i32 = arith.constant 0 : i32
    %c0_i32_0 = arith.constant 0 : i32
    %c0_i32_1 = arith.constant 0 : i32
    return %c0_i32, %c0_i32_0 : i32, i32
  }
  func.func @transform_1(%arg0: i32) -> (i32, i32) {
    %c0_i32 = arith.constant 0 : i32
    %c0_i32_0 = arith.constant 0 : i32
    %c0_i32_1 = arith.constant 0 : i32
    return %c0_i32, %c0_i32_0 : i32, i32
  }
  func.func @transform_2(%arg0: i32) -> (i32, i32) {
    %c0_i32 = arith.constant 0 : i32
    %c0_i32_0 = arith.constant 0 : i32
    %c0_i32_1 = arith.constant 0 : i32
    return %c0_i32, %c0_i32_0 : i32, i32
  }
  func.func @transform_3(%arg0: i32) -> (i32, i32) {
    %c0_i32 = arith.constant 0 : i32
    %c0_i32_0 = arith.constant 0 : i32
    %c0_i32_1 = arith.constant 0 : i32
    return %c0_i32, %c0_i32_0 : i32, i32
  }
  func.func @transform_4(%arg0: i32) -> (i32, i32) {
    %c0_i32 = arith.constant 0 : i32
    %c0_i32_0 = arith.constant 0 : i32
    %c0_i32_1 = arith.constant 0 : i32
    return %c0_i32, %c0_i32_0 : i32, i32
  }
}

</mosaic_0001>

<llo_original>
// kernel: tpu_custom_call.1
$region0: #{tpu_custom_call.1}
  #allocation0 [shape = 'u32[]', space=smem, size = 0x4, offset = 0x4, fixed_abs, tag = 'smem constant byte address 0x4 - core index']
  #allocation1 [shape = 'u32[144,128]{1,0:T(1,128)}', space=vmem, size = 0x12000, scoped, tag = 'internal scratch']
  %s0 = inlined_call_operand.hbm [shape: f32[8,512], index: 0, kind: input, shape index: {}]
  %s1 = inlined_call_operand.hbm [shape: f32[9,512], index: 1, kind: input, shape index: {}]
  %s2 = inlined_call_operand.hbm [shape: f32[16,73], index: 2, kind: input, shape index: {}]
  %s3 = inlined_call_operand.hbm [shape: f32[8,73], index: 3, kind: input, shape index: {}]
  %s4 = inlined_call_operand.hbm [shape: f32[8,512], index: 4, kind: output, shape index: {}]
  %s5 = sld [smem:[#allocation0]]
  $region42: #{tpu_custom_call.1} parent=0
    _
  %s7 = ssub.s32 1, %s5
  %s8 = scalar_select 0, %s7, %s5
  $region1: #{tpu_custom_call.1} parent=0
    #allocation2 [shape = 'u8[16384]{0}', space=vmem, size = 0x4000, scoped, tag = 'input window, operand 0, single buffered']
    #allocation3 [shape = 's32[1]{0}', space=sflag, size = 0x4, scoped, tag = 'scoped memory for tpu_custom_call.1']
    #allocation4 [shape = 's32[1]{0}', space=sflag, size = 0x4, scoped, tag = 'scoped memory for tpu_custom_call.1']
    #allocation5 [shape = 'u8[32768]{0}', space=vmem, size = 0x8000, scoped, tag = 'input window, operand 1, single buffered']
    #allocation6 [shape = 's32[1]{0}', space=sflag, size = 0x4, scoped, tag = 'scoped memory for tpu_custom_call.1']
    #allocation7 [shape = 'u8[8192]{0}', space=vmem, size = 0x2000, scoped, tag = 'input window, operand 2, single buffered']
    #allocation8 [shape = 'u8[4096]{0}', space=vmem, size = 0x1000, scoped, tag = 'input window, operand 3, single buffered']
    #allocation9 [shape = 's32[1]{0}', space=sflag, size = 0x4, scoped, tag = 'scoped memory for tpu_custom_call.1']
    #allocation10 [shape = 'u8[16384]{0}', space=vmem, size = 0x4000, scoped, tag = 'output window, operand 0, single buffered']
    %9 = vsyncpa [#allocation3], 0
    %10 = vsyncpa [#allocation6], 0
    %11 = vsyncpa [#allocation9], 0
    %12 = vsyncpa [#allocation4], 0
    // Predicated region
    $region2: #{tpu_custom_call.1} parent=1 // pred_check
      _
    $region3: #{tpu_custom_call.1} parent=1 // pred_check_branch
      %14 = sbr.rel (0) target = $region5
    $region4: #{tpu_custom_call.1} parent=1 // pred_region
      %s16 = ssub.s32 512, 512
      %17 = vsyncadd [#allocation3], %s16
      %s19 = sshll.u32 [#allocation2], 4
      %s20 = int_to_ptr.vmem [resolvable:$true] %s19
      %22 = dma.hbm_to_vmem [thread:$0]  %s0, 512, %s20, [#allocation3]
    $region5: #{tpu_custom_call.1} parent=1 // pred_fallthru
      _
    // Predicated region
    $region6: #{tpu_custom_call.1} parent=1 // pred_check
      _
    $region7: #{tpu_custom_call.1} parent=1 // pred_check_branch
      %24 = sbr.rel (0) target = $region9
    $region8: #{tpu_custom_call.1} parent=1 // pred_region
      %s26 = ssub.s32 1024, 1024
      %27 = vsyncadd [#allocation6], %s26
      %s28 = sshll.u32 [#allocation5], 4
      %s29 = int_to_ptr.vmem [resolvable:$true] %s28
      %34 = dma.hbm_to_vmem [thread:$0]  %s1, 1024, %s29, [#allocation6], 512, 512, 32
    $region9: #{tpu_custom_call.1} parent=1 // pred_fallthru
      _
    // Predicated region
    $region10: #{tpu_custom_call.1} parent=1 // pred_check
      _
    $region11: #{tpu_custom_call.1} parent=1 // pred_check_branch
      %36 = sbr.rel (0) target = $region13
    $region12: #{tpu_custom_call.1} parent=1 // pred_region
      %s38 = ssub.s32 256, 256
      %39 = vsyncadd [#allocation6], %s38
      %s40 = sshll.u32 [#allocation7], 4
      %s41 = int_to_ptr.vmem [resolvable:$true] %s40
      %46 = dma.hbm_to_vmem [thread:$0]  %s2, 256, %s41, [#allocation6], 128, 128, 8
    $region13: #{tpu_custom_call.1} parent=1 // pred_fallthru
      _
    // Predicated region
    $region14: #{tpu_custom_call.1} parent=1 // pred_check
      _
    $region15: #{tpu_custom_call.1} parent=1 // pred_check_branch
      %48 = sbr.rel (0) target = $region17
    $region16: #{tpu_custom_call.1} parent=1 // pred_region
      %s50 = ssub.s32 128, 128
      %51 = vsyncadd [#allocation9], %s50
      %s53 = sshll.u32 [#allocation8], 4
      %s54 = int_to_ptr.vmem [resolvable:$true] %s53
      %56 = dma.hbm_to_vmem [thread:$0]  %s3, 128, %s54, [#allocation9]
    $region17: #{tpu_custom_call.1} parent=1 // pred_fallthru
      _
    // Predicated region
    $region18: #{tpu_custom_call.1} parent=1 // pred_check
      _
    $region19: #{tpu_custom_call.1} parent=1 // pred_check_branch
      %58 = sbr.rel (0) target = $region21
    $region20: #{tpu_custom_call.1} parent=1 // pred_region
      %59 = dma.done [#allocation3], 512
    $region21: #{tpu_custom_call.1} parent=1 // pred_fallthru
      _
    // Predicated region
    $region22: #{tpu_custom_call.1} parent=1 // pred_check
      _
    $region23: #{tpu_custom_call.1} parent=1 // pred_check_branch
      %61 = sbr.rel (0) target = $region25
    $region24: #{tpu_custom_call.1} parent=1 // pred_region
      %62 = dma.done [#allocation6], 1024
    $region25: #{tpu_custom_call.1} parent=1 // pred_fallthru
      _
    // Predicated region
    $region26: #{tpu_custom_call.1} parent=1 // pred_check
      _
    $region27: #{tpu_custom_call.1} parent=1 // pred_check_branch
      %64 = sbr.rel (0) target = $region29
    $region28: #{tpu_custom_call.1} parent=1 // pred_region
      %65 = dma.done [#allocation6], 256
    $region29: #{tpu_custom_call.1} parent=1 // pred_fallthru
      _
    // Predicated region
    $region30: #{tpu_custom_call.1} parent=1 // pred_check
      _
    $region31: #{tpu_custom_call.1} parent=1 // pred_check_branch
      %67 = sbr.rel (0) target = $region33
    $region32: #{tpu_custom_call.1} parent=1 // pred_region
      %68 = dma.done [#allocation9], 128
    $region33: #{tpu_custom_call.1} parent=1 // pred_fallthru
      _
    %v69 = vld [vmem:[#allocation2] sm:$0xff]
    %v70 = vld [vmem:[#allocation2 + $0x8] sm:$0xff]
    %v71 = vld [vmem:[#allocation2 + $0x10] sm:$0xff]
    %v72 = vld [vmem:[#allocation2 + $0x18] sm:$0xff]
    %74 = vrot.lane.b32.xlu0 %v72, 17
    %v75 = vpop.permute.xlu0 %74
    %80 = vrot.lane.b32.xlu0 %v69, 17
    %v81 = vpop.permute.xlu0 %80
    %82 = vrot.lane.b32.xlu0 %v70, 17
    %v83 = vpop.permute.xlu0 %82
    %84 = vrot.lane.b32.xlu0 %v71, 17
    %v85 = vpop.permute.xlu0 %84
    %vm86 = vcmask 138240
    %v87 = vsel %vm86, %v81, %v83
    %v88 = vsel %vm86, %v83, %v85
    %v89 = vsel %vm86, %v85, %v75
    %v94 = vsel %vm86, %v75, %v81
    %v95 = vld [vmem:[#allocation5] ss:$8 sm:$0xf]
    %v97 = vlaneseq
    %v98 = vshrl.u32 %v97, 7
    %v99 = vsub.s32 0, %v98
    %v100 = vrot.slane %v95, %v99
    %v101 = vlaneseq
    %v102 = vshrl.u32 %v101, 7
    %v103 = vsub.s32 1, %v102
    %v104 = vrot.slane %v95, %v103
    %v105 = vlaneseq
    %v106 = vshrl.u32 %v105, 7
    %v107 = vsub.s32 2, %v106
    %v108 = vrot.slane %v95, %v107
    %v109 = vlaneseq
    %v110 = vshrl.u32 %v109, 7
    %v111 = vsub.s32 3, %v110
    %v112 = vrot.slane %v95, %v111
    %v117 = vmul.f32 %v94, %v100
    %v118 = vmul.f32 %v87, %v104
    %v119 = vmul.f32 %v88, %v108
    %v120 = vmul.f32 %v89, %v112
    %121 = vrot.lane.b32.xlu0 %v72, 16
    %v122 = vpop.permute.xlu0 %121
    %124 = vrot.lane.b32.xlu0 %v69, 16
    %v125 = vpop.permute.xlu0 %124
    %126 = vrot.lane.b32.xlu0 %v70, 16
    %v127 = vpop.permute.xlu0 %126
    %128 = vrot.lane.b32.xlu0 %v71, 16
    %v129 = vpop.permute.xlu0 %128
    %vm130 = vcmask 130048
    %v131 = vsel %vm130, %v125, %v127
    %v132 = vsel %vm130, %v127, %v129
    %v133 = vsel %vm130, %v129, %v122
    %v138 = vsel %vm130, %v122, %v125
    %s139 = scalar_lea.vmem [#allocation5], 1
    %v140 = vld [vmem:[%s139] ss:$8 sm:$0xf]
    %v142 = vlaneseq
    %v143 = vshrl.u32 %v142, 7
    %v144 = vsub.s32 0, %v143
    %v145 = vrot.slane %v140, %v144
    %v146 = vlaneseq
    %v147 = vshrl.u32 %v146, 7
    %v148 = vsub.s32 1, %v147
    %v149 = vrot.slane %v140, %v148
    %v150 = vlaneseq
    %v151 = vshrl.u32 %v150, 7
    %v152 = vsub.s32 2, %v151
    %v153 = vrot.slane %v140, %v152
    %v154 = vlaneseq
    %v155 = vshrl.u32 %v154, 7
    %v156 = vsub.s32 3, %v155
    %v157 = vrot.slane %v140, %v156
    %v162 = vmul.f32 %v138, %v145
    %v163 = vmul.f32 %v131, %v149
    %v164 = vmul.f32 %v132, %v153
    %v165 = vmul.f32 %v133, %v157
    %166 = vrot.lane.b32.xlu0 %v72, 15
    %v167 = vpop.permute.xlu0 %166
    %169 = vrot.lane.b32.xlu0 %v69, 15
    %v170 = vpop.permute.xlu0 %169
    %171 = vrot.lane.b32.xlu0 %v70, 15
    %v172 = vpop.permute.xlu0 %171
    %173 = vrot.lane.b32.xlu0 %v71, 15
    %v174 = vpop.permute.xlu0 %173
    %vm175 = vcmask 121856
    %v176 = vsel %vm175, %v170, %v172
    %v177 = vsel %vm175, %v172, %v174
    %v178 = vsel %vm175, %v174, %v167
    %v183 = vsel %vm175, %v167, %v170
    %s184 = scalar_lea.vmem [#allocation5], 2
    %v185 = vld [vmem:[%s184] ss:$8 sm:$0xf]
    %v187 = vlaneseq
    %v188 = vshrl.u32 %v187, 7
    %v189 = vsub.s32 0, %v188
    %v190 = vrot.slane %v185, %v189
    %v191 = vlaneseq
    %v192 = vshrl.u32 %v191, 7
    %v193 = vsub.s32 1, %v192
    %v194 = vrot.slane %v185, %v193
    %v195 = vlaneseq
    %v196 = vshrl.u32 %v195, 7
    %v197 = vsub.s32 2, %v196
    %v198 = vrot.slane %v185, %v197
    %v199 = vlaneseq
    %v200 = vshrl.u32 %v199, 7
    %v201 = vsub.s32 3, %v200
    %v202 = vrot.slane %v185, %v201
    %v207 = vmul.f32 %v183, %v190
    %v208 = vmul.f32 %v176, %v194
    %v209 = vmul.f32 %v177, %v198
    %v210 = vmul.f32 %v178, %v202
    %211 = vrot.lane.b32.xlu0 %v72, 1
    %v212 = vpop.permute.xlu0 %211
    %214 = vrot.lane.b32.xlu0 %v69, 1
    %v215 = vpop.permute.xlu0 %214
    %216 = vrot.lane.b32.xlu0 %v70, 1
    %v217 = vpop.permute.xlu0 %216
    %218 = vrot.lane.b32.xlu0 %v71, 1
    %v219 = vpop.permute.xlu0 %218
    %vm220 = vcmask 7168
    %v221 = vsel %vm220, %v215, %v217
    %v222 = vsel %vm220, %v217, %v219
    %v223 = vsel %vm220, %v219, %v212
    %v228 = vsel %vm220, %v212, %v215
    %s229 = scalar_lea.vmem [#allocation5], 3
    %v230 = vld [vmem:[%s229] ss:$8 sm:$0xf]
    %v232 = vlaneseq
    %v233 = vshrl.u32 %v232, 7
    %v234 = vsub.s32 0, %v233
    %v235 = vrot.slane %v230, %v234
    %v236 = vlaneseq
    %v237 = vshrl.u32 %v236, 7
    %v238 = vsub.s32 1, %v237
    %v239 = vrot.slane %v230, %v238
    %v240 = vlaneseq
    %v241 = vshrl.u32 %v240, 7
    %v242 = vsub.s32 2, %v241
    %v243 = vrot.slane %v230, %v242
    %v244 = vlaneseq
    %v245 = vshrl.u32 %v244, 7
    %v246 = vsub.s32 3, %v245
    %v247 = vrot.slane %v230, %v246
    %v252 = vmul.f32 %v228, %v235
    %v253 = vmul.f32 %v221, %v239
    %v254 = vmul.f32 %v222, %v243
    %v255 = vmul.f32 %v223, %v247
    %256 = vrot.lane.b32.xlu0 %v69, 127
    %v257 = vpop.permute.xlu0 %256
    %258 = vrot.lane.b32.xlu0 %v70, 127
    %v259 = vpop.permute.xlu0 %258
    %260 = vrot.lane.b32.xlu0 %v71, 127
    %v261 = vpop.permute.xlu0 %260
    %262 = vrot.lane.b32.xlu0 %v72, 127
    %v263 = vpop.permute.xlu0 %262
    %vm264 = vcmask 1039360
    %v265 = vsel %vm264, %v257, %v259
    %v266 = vsel %vm264, %v259, %v261
    %v267 = vsel %vm264, %v261, %v263
    %v273 = vsel %vm264, %v263, %v257
    %s274 = scalar_lea.vmem [#allocation5], 5
    %v275 = vld [vmem:[%s274] ss:$8 sm:$0xf]
    %v277 = vlaneseq
    %v278 = vshrl.u32 %v277, 7
    %v279 = vsub.s32 0, %v278
    %v280 = vrot.slane %v275, %v279
    %v281 = vlaneseq
    %v282 = vshrl.u32 %v281, 7
    %v283 = vsub.s32 1, %v282
    %v284 = vrot.slane %v275, %v283
    %v285 = vlaneseq
    %v286 = vshrl.u32 %v285, 7
    %v287 = vsub.s32 2, %v286
    %v288 = vrot.slane %v275, %v287
    %v289 = vlaneseq
    %v290 = vshrl.u32 %v289, 7
    %v291 = vsub.s32 3, %v290
    %v292 = vrot.slane %v275, %v291
    %v297 = vmul.f32 %v265, %v280
    %v298 = vmul.f32 %v266, %v284
    %v299 = vmul.f32 %v267, %v288
    %v300 = vmul.f32 %v273, %v292
    %301 = vrot.lane.b32.xlu0 %v69, 113
    %v302 = vpop.permute.xlu0 %301
    %303 = vrot.lane.b32.xlu0 %v70, 113
    %v304 = vpop.permute.xlu0 %303
    %305 = vrot.lane.b32.xlu0 %v71, 113
    %v306 = vpop.permute.xlu0 %305
    %307 = vrot.lane.b32.xlu0 %v72, 113
    %v308 = vpop.permute.xlu0 %307
    %vm309 = vcmask 924672
    %v310 = vsel %vm309, %v302, %v304
    %v311 = vsel %vm309, %v304, %v306
    %v312 = vsel %vm309, %v306, %v308
    %v318 = vsel %vm309, %v308, %v302
    %s319 = scalar_lea.vmem [#allocation5], 6
    %v320 = vld [vmem:[%s319] ss:$8 sm:$0xf]
    %v322 = vlaneseq
    %v323 = vshrl.u32 %v322, 7
    %v324 = vsub.s32 0, %v323
    %v325 = vrot.slane %v320, %v324
    %v326 = vlaneseq
    %v327 = vshrl.u32 %v326, 7
    %v328 = vsub.s32 1, %v327
    %v329 = vrot.slane %v320, %v328
    %v330 = vlaneseq
    %v331 = vshrl.u32 %v330, 7
    %v332 = vsub.s32 2, %v331
    %v333 = vrot.slane %v320, %v332
    %v334 = vlaneseq
    %v335 = vshrl.u32 %v334, 7
    %v336 = vsub.s32 3, %v335
    %v337 = vrot.slane %v320, %v336
    %v342 = vmul.f32 %v310, %v325
    %v343 = vmul.f32 %v311, %v329
    %v344 = vmul.f32 %v312, %v333
    %v345 = vmul.f32 %v318, %v337
    %346 = vrot.lane.b32.xlu0 %v69, 112
    %v347 = vpop.permute.xlu0 %346
    %348 = vrot.lane.b32.xlu0 %v70, 112
    %v349 = vpop.permute.xlu0 %348
    %350 = vrot.lane.b32.xlu0 %v71, 112
    %v351 = vpop.permute.xlu0 %350
    %352 = vrot.lane.b32.xlu0 %v72, 112
    %v353 = vpop.permute.xlu0 %352
    %vm354 = vcmask 916480
    %v355 = vsel %vm354, %v347, %v349
    %v356 = vsel %vm354, %v349, %v351
    %v357 = vsel %vm354, %v351, %v353
    %v363 = vsel %vm354, %v353, %v347
    %s364 = scalar_lea.vmem [#allocation5], 7
    %v365 = vld [vmem:[%s364] ss:$8 sm:$0xf]
    %v367 = vlaneseq
    %v368 = vshrl.u32 %v367, 7
    %v369 = vsub.s32 0, %v368
    %v370 = vrot.slane %v365, %v369
    %v371 = vlaneseq
    %v372 = vshrl.u32 %v371, 7
    %v373 = vsub.s32 1, %v372
    %v374 = vrot.slane %v365, %v373
    %v375 = vlaneseq
    %v376 = vshrl.u32 %v375, 7
    %v377 = vsub.s32 2, %v376
    %v378 = vrot.slane %v365, %v377
    %v379 = vlaneseq
    %v380 = vshrl.u32 %v379, 7
    %v381 = vsub.s32 3, %v380
    %v382 = vrot.slane %v365, %v381
    %v387 = vmul.f32 %v355, %v370
    %v388 = vmul.f32 %v356, %v374
    %v389 = vmul.f32 %v357, %v378
    %v390 = vmul.f32 %v363, %v382
    %391 = vrot.lane.b32.xlu0 %v69, 111
    %v392 = vpop.permute.xlu0 %391
    %393 = vrot.lane.b32.xlu0 %v70, 111
    %v394 = vpop.permute.xlu0 %393
    %395 = vrot.lane.b32.xlu0 %v71, 111
    %v396 = vpop.permute.xlu0 %395
    %397 = vrot.lane.b32.xlu0 %v72, 111
    %v398 = vpop.permute.xlu0 %397
    %vm399 = vcmask 908288
    %v400 = vsel %vm399, %v392, %v394
    %v401 = vsel %vm399, %v394, %v396
    %v402 = vsel %vm399, %v396, %v398
    %v408 = vsel %vm399, %v398, %v392
    %s409 = scalar_lea.vmem [#allocation5], 32
    %v410 = vld [vmem:[%s409] ss:$8 sm:$0xf]
    %v412 = vlaneseq
    %v413 = vshrl.u32 %v412, 7
    %v414 = vsub.s32 0, %v413
    %v415 = vrot.slane %v410, %v414
    %v416 = vlaneseq
    %v417 = vshrl.u32 %v416, 7
    %v418 = vsub.s32 1, %v417
    %v419 = vrot.slane %v410, %v418
    %v420 = vlaneseq
    %v421 = vshrl.u32 %v420, 7
    %v422 = vsub.s32 2, %v421
    %v423 = vrot.slane %v410, %v422
    %v424 = vlaneseq
    %v425 = vshrl.u32 %v424, 7
    %v426 = vsub.s32 3, %v425
    %v427 = vrot.slane %v410, %v426
    %v432 = vmul.f32 %v400, %v415
    %v433 = vmul.f32 %v401, %v419
    %v434 = vmul.f32 %v402, %v423
    %v435 = vmul.f32 %v408, %v427
    %v436 = vld [vmem:[#allocation7] sm:$0xff]
    %v437 = vld [vmem:[#allocation7 + $0x8] sm:$0xff]
    %vm438 = vcmask 596992
    %v440 = vsel %vm438, %v436, 0
    %v443 = vsel %vm438, %v437, 0
    %vm445 = vcmask 1040384
    %v447 = vsel %vm445, 1.0, 0
    %449 = vmatprep.subr.mxu0 0.0
    %450 = vmatpush1.msra.mxu0 0.0
    %451 = vmatprep.subr.mxu0 0.0
    %452 = vmatpush1.msra.mxu0 0.0
    %453 = vmatprep.subr.mxu0 0.0
    %454 = vmatpush1.msra.mxu0 0.0
    %455 = vmatprep.subr.mxu0 0.0
    %456 = vmatpush1.msra.mxu0 0.0
    %457 = vmatprep.subr.mxu0 0.0
    %458 = vmatpush1.msra.mxu0 0.0
    %459 = vmatprep.subr.mxu0 0.0
    %460 = vmatpush1.msra.mxu0 0.0
    %461 = vmatprep.subr.mxu0 %v447
    %462 = vmatpush1.msra.mxu0 %v447
    %463 = vmatprep.subr.mxu0 %v433
    %464 = vmatpush1.msra.mxu0 %v432
    %465 = vmatprep.subr.mxu0 %v388
    %466 = vmatpush1.msra.mxu0 %v387
    %467 = vmatprep.subr.mxu0 %v343
    %468 = vmatpush1.msra.mxu0 %v342
    %469 = vmatprep.subr.mxu0 %v298
    %470 = vmatpush1.msra.mxu0 %v297
    %471 = vmatprep.subr.mxu0 %v70
    %472 = vmatpush1.msra.mxu0 %v69
    %473 = vmatprep.subr.mxu0 %v253
    %474 = vmatpush1.msra.mxu0 %v252
    %475 = vmatprep.subr.mxu0 %v208
    %476 = vmatpush1.msra.mxu0 %v207
    %477 = vmatprep.subr.mxu0 %v163
    %478 = vmatpush1.msra.mxu0 %v162
    %479 = vmatprep.subr.mxu0 %v118
    %480 = vmatpush1.msra.mxu0 %v117
    %481 = vmatprep.subr.mxu0 0.0
    %482 = vmatpush2.msra.mxu0 0.0
    %483 = vmatprep.subr.mxu0 0.0
    %484 = vmatpush2.msra.mxu0 0.0
    %485 = vmatprep.subr.mxu0 0.0
    %486 = vmatpush2.msra.mxu0 0.0
    %487 = vmatprep.subr.mxu0 0.0
    %488 = vmatpush2.msra.mxu0 0.0
    %489 = vmatprep.subr.mxu0 0.0
    %490 = vmatpush2.msra.mxu0 0.0
    %491 = vmatprep.subr.mxu0 0.0
    %492 = vmatpush2.msra.mxu0 0.0
    %493 = vmatprep.subr.mxu0 0.0
    %494 = vmatpush2.msra.mxu0 0.0
    %495 = vmatprep.subr.mxu0 0.0
    %496 = vmatpush2.msra.mxu0 0.0
    %497 = vmatprep.subr.mxu0 0.0
    %498 = vmatpush2.msra.mxu0 0.0
    %499 = vmatprep.subr.mxu0 0.0
    %500 = vmatpush2.msra.mxu0 0.0
    %501 = vmatprep.subr.mxu0 0.0
    %502 = vmatpush2.msra.mxu0 0.0
    %503 = vmatprep.subr.mxu0 0.0
    %504 = vmatpush2.msra.mxu0 0.0
    %505 = vmatprep.subr.mxu0 0.0
    %506 = vmatpush2.msra.mxu0 0.0
    %507 = vmatprep.subr.mxu0 0.0
    %508 = vmatpush2.msra.mxu0 0.0
    %509 = vmatprep.subr.mxu0 0.0
    %510 = vmatpush2.msra.mxu0 0.0
    %511 = vmatprep.subr.mxu0 0.0
    %512 = vmatpush2.msra.mxu0 0.0
    %513 = vmatprep.mubr.f32.mxu0 0.0
    %514 = vmatmul.mubr.f32.gmra.mxu0 %v440
    %v515 = vpop.f32.mrf.mxu0
    %v516 = vadd.f32 0.0, %v515
    %v517 = vpop.f32.mrf.mxu0
    %v518 = vadd.f32 0.0, %v517
    %519 = vmatprep.mubr.f32.mxu0 0.0
    %520 = vmatmul.mubr.f32.gmra.mxu0 %v443
    %v521 = vpop.f32.mrf.mxu0
    %v522 = vadd.f32 0.0, %v521
    %v523 = vpop.f32.mrf.mxu0
    %v524 = vadd.f32 0.0, %v523
    %525 = vdwg.mxu0
    %526 = vmatprep.subr.mxu0 0.0
    %527 = vmatpush1.msra.mxu0 0.0
    %528 = vmatprep.subr.mxu0 0.0
    %529 = vmatpush1.msra.mxu0 0.0
    %530 = vmatprep.subr.mxu0 0.0
    %531 = vmatpush1.msra.mxu0 0.0
    %532 = vmatprep.subr.mxu0 0.0
    %533 = vmatpush1.msra.mxu0 0.0
    %534 = vmatprep.subr.mxu0 0.0
    %535 = vmatpush1.msra.mxu0 0.0
    %536 = vmatprep.subr.mxu0 0.0
    %537 = vmatpush1.msra.mxu0 0.0
    %538 = vmatprep.subr.mxu0 %v447
    %539 = vmatpush1.msra.mxu0 %v447
    %540 = vmatprep.subr.mxu0 %v435
    %541 = vmatpush1.msra.mxu0 %v434
    %542 = vmatprep.subr.mxu0 %v390
    %543 = vmatpush1.msra.mxu0 %v389
    %544 = vmatprep.subr.mxu0 %v345
    %545 = vmatpush1.msra.mxu0 %v344
    %546 = vmatprep.subr.mxu0 %v300
    %547 = vmatpush1.msra.mxu0 %v299
    %548 = vmatprep.subr.mxu0 %v72
    %549 = vmatpush1.msra.mxu0 %v71
    %550 = vmatprep.subr.mxu0 %v255
    %551 = vmatpush1.msra.mxu0 %v254
    %552 = vmatprep.subr.mxu0 %v210
    %553 = vmatpush1.msra.mxu0 %v209
    %554 = vmatprep.subr.mxu0 %v165
    %555 = vmatpush1.msra.mxu0 %v164
    %556 = vmatprep.subr.mxu0 %v120
    %557 = vmatpush1.msra.mxu0 %v119
    %558 = vmatprep.subr.mxu0 0.0
    %559 = vmatpush2.msra.mxu0 0.0
    %560 = vmatprep.subr.mxu0 0.0
    %561 = vmatpush2.msra.mxu0 0.0
    %562 = vmatprep.subr.mxu0 0.0
    %563 = vmatpush2.msra.mxu0 0.0
    %564 = vmatprep.subr.mxu0 0.0
    %565 = vmatpush2.msra.mxu0 0.0
    %566 = vmatprep.subr.mxu0 0.0
    %567 = vmatpush2.msra.mxu0 0.0
    %568 = vmatprep.subr.mxu0 0.0
    %569 = vmatpush2.msra.mxu0 0.0
    %570 = vmatprep.subr.mxu0 0.0
    %571 = vmatpush2.msra.mxu0 0.0
    %572 = vmatprep.subr.mxu0 0.0
    %573 = vmatpush2.msra.mxu0 0.0
    %574 = vmatprep.subr.mxu0 0.0
    %575 = vmatpush2.msra.mxu0 0.0
    %576 = vmatprep.subr.mxu0 0.0
    %577 = vmatpush2.msra.mxu0 0.0
    %578 = vmatprep.subr.mxu0 0.0
    %579 = vmatpush2.msra.mxu0 0.0
    %580 = vmatprep.subr.mxu0 0.0
    %581 = vmatpush2.msra.mxu0 0.0
    %582 = vmatprep.subr.mxu0 0.0
    %583 = vmatpush2.msra.mxu0 0.0
    %584 = vmatprep.subr.mxu0 0.0
    %585 = vmatpush2.msra.mxu0 0.0
    %586 = vmatprep.subr.mxu0 0.0
    %587 = vmatpush2.msra.mxu0 0.0
    %588 = vmatprep.subr.mxu0 0.0
    %589 = vmatpush2.msra.mxu0 0.0
    %590 = vmatprep.mubr.f32.mxu0 0.0
    %591 = vmatmul.mubr.f32.gmra.mxu0 %v440
    %v592 = vpop.f32.mrf.mxu0
    %v593 = vadd.f32 0.0, %v592
    %v594 = vpop.f32.mrf.mxu0
    %v595 = vadd.f32 0.0, %v594
    %596 = vmatprep.mubr.f32.mxu0 0.0
    %597 = vmatmul.mubr.f32.gmra.mxu0 %v443
    %v598 = vpop.f32.mrf.mxu0
    %v599 = vadd.f32 0.0, %v598
    %v600 = vpop.f32.mrf.mxu0
    %v601 = vadd.f32 0.0, %v600
    %602 = vdwg.mxu0
    %v603 = vmax.f32 %v516, 0.0
    %v604 = vmax.f32 %v518, 0.0
    %v605 = vmax.f32 %v593, 0.0
    %v606 = vmax.f32 %v595, 0.0
    %608 = vrot.lane.b32.xlu0 %v606, 17
    %v609 = vpop.permute.xlu0 %608
    %614 = vrot.lane.b32.xlu0 %v603, 17
    %v615 = vpop.permute.xlu0 %614
    %616 = vrot.lane.b32.xlu0 %v604, 17
    %v617 = vpop.permute.xlu0 %616
    %618 = vrot.lane.b32.xlu0 %v605, 17
    %v619 = vpop.permute.xlu0 %618
    %v620 = vsel %vm86, %v615, %v617
    %v621 = vsel %vm86, %v617, %v619
    %v622 = vsel %vm86, %v619, %v609
    %v627 = vsel %vm86, %v609, %v615
    %v628 = vmul.f32 %v627, %v100
    %v629 = vmul.f32 %v620, %v104
    %v630 = vmul.f32 %v621, %v108
    %v631 = vmul.f32 %v622, %v112
    %632 = vrot.lane.b32.xlu0 %v606, 16
    %v633 = vpop.permute.xlu0 %632
    %635 = vrot.lane.b32.xlu0 %v603, 16
    %v636 = vpop.permute.xlu0 %635
    %637 = vrot.lane.b32.xlu0 %v604, 16
    %v638 = vpop.permute.xlu0 %637
    %639 = vrot.lane.b32.xlu0 %v605, 16
    %v640 = vpop.permute.xlu0 %639
    %v641 = vsel %vm130, %v636, %v638
    %v642 = vsel %vm130, %v638, %v640
    %v643 = vsel %vm130, %v640, %v633
    %v648 = vsel %vm130, %v633, %v636
    %v649 = vmul.f32 %v648, %v145
    %v650 = vmul.f32 %v641, %v149
    %v651 = vmul.f32 %v642, %v153
    %v652 = vmul.f32 %v643, %v157
    %653 = vrot.lane.b32.xlu0 %v606, 15
    %v654 = vpop.permute.xlu0 %653
    %656 = vrot.lane.b32.xlu0 %v603, 15
    %v657 = vpop.permute.xlu0 %656
    %658 = vrot.lane.b32.xlu0 %v604, 15
    %v659 = vpop.permute.xlu0 %658
    %660 = vrot.lane.b32.xlu0 %v605, 15
    %v661 = vpop.permute.xlu0 %660
    %v662 = vsel %vm175, %v657, %v659
    %v663 = vsel %vm175, %v659, %v661
    %v664 = vsel %vm175, %v661, %v654
    %v669 = vsel %vm175, %v654, %v657
    %v670 = vmul.f32 %v669, %v190
    %v671 = vmul.f32 %v662, %v194
    %v672 = vmul.f32 %v663, %v198
    %v673 = vmul.f32 %v664, %v202
    %674 = vrot.lane.b32.xlu0 %v606, 1
    %v675 = vpop.permute.xlu0 %674
    %677 = vrot.lane.b32.xlu0 %v603, 1
    %v678 = vpop.permute.xlu0 %677
    %679 = vrot.lane.b32.xlu0 %v604, 1
    %v680 = vpop.permute.xlu0 %679
    %681 = vrot.lane.b32.xlu0 %v605, 1
    %v682 = vpop.permute.xlu0 %681
    %v683 = vsel %vm220, %v678, %v680
    %v684 = vsel %vm220, %v680, %v682
    %v685 = vsel %vm220, %v682, %v675
    %v690 = vsel %vm220, %v675, %v678
    %v691 = vmul.f32 %v690, %v235
    %v692 = vmul.f32 %v683, %v239
    %v693 = vmul.f32 %v684, %v243
    %v694 = vmul.f32 %v685, %v247
    %695 = vrot.lane.b32.xlu0 %v603, 127
    %v696 = vpop.permute.xlu0 %695
    %697 = vrot.lane.b32.xlu0 %v604, 127
    %v698 = vpop.permute.xlu0 %697
    %699 = vrot.lane.b32.xlu0 %v605, 127
    %v700 = vpop.permute.xlu0 %699
    %701 = vrot.lane.b32.xlu0 %v606, 127
    %v702 = vpop.permute.xlu0 %701
    %v703 = vsel %vm264, %v696, %v698
    %v704 = vsel %vm264, %v698, %v700
    %v705 = vsel %vm264, %v700, %v702
    %v711 = vsel %vm264, %v702, %v696
    %v712 = vmul.f32 %v703, %v280
    %v713 = vmul.f32 %v704, %v284
    %v714 = vmul.f32 %v705, %v288
    %v715 = vmul.f32 %v711, %v292
    %716 = vrot.lane.b32.xlu0 %v603, 113
    %v717 = vpop.permute.xlu0 %716
    %718 = vrot.lane.b32.xlu0 %v604, 113
    %v719 = vpop.permute.xlu0 %718
    %720 = vrot.lane.b32.xlu0 %v605, 113
    %v721 = vpop.permute.xlu0 %720
    %722 = vrot.lane.b32.xlu0 %v606, 113
    %v723 = vpop.permute.xlu0 %722
    %v724 = vsel %vm309, %v717, %v719
    %v725 = vsel %vm309, %v719, %v721
    %v726 = vsel %vm309, %v721, %v723
    %v732 = vsel %vm309, %v723, %v717
    %v733 = vmul.f32 %v724, %v325
    %v734 = vmul.f32 %v725, %v329
    %v735 = vmul.f32 %v726, %v333
    %v736 = vmul.f32 %v732, %v337
    %737 = vrot.lane.b32.xlu0 %v603, 112
    %v738 = vpop.permute.xlu0 %737
    %739 = vrot.lane.b32.xlu0 %v604, 112
    %v740 = vpop.permute.xlu0 %739
    %741 = vrot.lane.b32.xlu0 %v605, 112
    %v742 = vpop.permute.xlu0 %741
    %743 = vrot.lane.b32.xlu0 %v606, 112
    %v744 = vpop.permute.xlu0 %743
    %v745 = vsel %vm354, %v738, %v740
    %v746 = vsel %vm354, %v740, %v742
    %v747 = vsel %vm354, %v742, %v744
    %v753 = vsel %vm354, %v744, %v738
    %v754 = vmul.f32 %v745, %v370
    %v755 = vmul.f32 %v746, %v374
    %v756 = vmul.f32 %v747, %v378
    %v757 = vmul.f32 %v753, %v382
    %758 = vrot.lane.b32.xlu0 %v603, 111
    %v759 = vpop.permute.xlu0 %758
    %760 = vrot.lane.b32.xlu0 %v604, 111
    %v761 = vpop.permute.xlu0 %760
    %762 = vrot.lane.b32.xlu0 %v605, 111
    %v763 = vpop.permute.xlu0 %762
    %764 = vrot.lane.b32.xlu0 %v606, 111
    %v765 = vpop.permute.xlu0 %764
    %v766 = vsel %vm399, %v759, %v761
    %v767 = vsel %vm399, %v761, %v763
    %v768 = vsel %vm399, %v763, %v765
    %v774 = vsel %vm399, %v765, %v759
    %v775 = vmul.f32 %v766, %v415
    %v776 = vmul.f32 %v767, %v419
    %v777 = vmul.f32 %v768, %v423
    %v778 = vmul.f32 %v774, %v427
    %v779 = vld [vmem:[#allocation8] sm:$0xff]
    %v781 = vsel %vm438, %v779, 0
    %783 = vmatprep.subr.mxu0 0.0
    %784 = vmatpush1.msra.mxu0 0.0
    %785 = vmatprep.subr.mxu0 0.0
    %786 = vmatpush1.msra.mxu0 0.0
    %787 = vmatprep.subr.mxu0 0.0
    %788 = vmatpush1.msra.mxu0 0.0
    %789 = vmatprep.subr.mxu0 0.0
    %790 = vmatpush1.msra.mxu0 0.0
    %791 = vmatprep.subr.mxu0 0.0
    %792 = vmatpush1.msra.mxu0 0.0
    %793 = vmatprep.subr.mxu0 0.0
    %794 = vmatpush1.msra.mxu0 0.0
    %795 = vmatprep.subr.mxu0 %v447
    %796 = vmatpush1.msra.mxu0 %v447
    %797 = vmatprep.subr.mxu0 %v776
    %798 = vmatpush1.msra.mxu0 %v775
    %799 = vmatprep.subr.mxu0 %v755
    %800 = vmatpush1.msra.mxu0 %v754
    %801 = vmatprep.subr.mxu0 %v734
    %802 = vmatpush1.msra.mxu0 %v733
    %803 = vmatprep.subr.mxu0 %v713
    %804 = vmatpush1.msra.mxu0 %v712
    %805 = vmatprep.subr.mxu0 %v604
    %806 = vmatpush1.msra.mxu0 %v603
    %807 = vmatprep.subr.mxu0 %v692
    %808 = vmatpush1.msra.mxu0 %v691
    %809 = vmatprep.subr.mxu0 %v671
    %810 = vmatpush1.msra.mxu0 %v670
    %811 = vmatprep.subr.mxu0 %v650
    %812 = vmatpush1.msra.mxu0 %v649
    %813 = vmatprep.subr.mxu0 %v629
    %814 = vmatpush1.msra.mxu0 %v628
    %815 = vmatprep.subr.mxu0 0.0
    %816 = vmatpush2.msra.mxu0 0.0
    %817 = vmatprep.subr.mxu0 0.0
    %818 = vmatpush2.msra.mxu0 0.0
    %819 = vmatprep.subr.mxu0 0.0
    %820 = vmatpush2.msra.mxu0 0.0
    %821 = vmatprep.subr.mxu0 0.0
    %822 = vmatpush2.msra.mxu0 0.0
    %823 = vmatprep.subr.mxu0 0.0
    %824 = vmatpush2.msra.mxu0 0.0
    %825 = vmatprep.subr.mxu0 0.0
    %826 = vmatpush2.msra.mxu0 0.0
    %827 = vmatprep.subr.mxu0 0.0
    %828 = vmatpush2.msra.mxu0 0.0
    %829 = vmatprep.subr.mxu0 0.0
    %830 = vmatpush2.msra.mxu0 0.0
    %831 = vmatprep.subr.mxu0 0.0
    %832 = vmatpush2.msra.mxu0 0.0
    %833 = vmatprep.subr.mxu0 0.0
    %834 = vmatpush2.msra.mxu0 0.0
    %835 = vmatprep.subr.mxu0 0.0
    %836 = vmatpush2.msra.mxu0 0.0
    %837 = vmatprep.subr.mxu0 0.0
    %838 = vmatpush2.msra.mxu0 0.0
    %839 = vmatprep.subr.mxu0 0.0
    %840 = vmatpush2.msra.mxu0 0.0
    %841 = vmatprep.subr.mxu0 0.0
    %842 = vmatpush2.msra.mxu0 0.0
    %843 = vmatprep.subr.mxu0 0.0
    %844 = vmatpush2.msra.mxu0 0.0
    %845 = vmatprep.subr.mxu0 0.0
    %846 = vmatpush2.msra.mxu0 0.0
    %847 = vmatprep.mubr.f32.mxu0 0.0
    %848 = vmatmul.mubr.f32.gmra.mxu0 %v781
    %v849 = vpop.f32.mrf.mxu0
    %v850 = vadd.f32 0.0, %v849
    %v851 = vpop.f32.mrf.mxu0
    %v852 = vadd.f32 0.0, %v851
    %853 = vdwg.mxu0
    %854 = vmatprep.subr.mxu0 0.0
    %855 = vmatpush1.msra.mxu0 0.0
    %856 = vmatprep.subr.mxu0 0.0
    %857 = vmatpush1.msra.mxu0 0.0
    %858 = vmatprep.subr.mxu0 0.0
    %859 = vmatpush1.msra.mxu0 0.0
    %860 = vmatprep.subr.mxu0 0.0
    %861 = vmatpush1.msra.mxu0 0.0
    %862 = vmatprep.subr.mxu0 0.0
    %863 = vmatpush1.msra.mxu0 0.0
    %864 = vmatprep.subr.mxu0 0.0
    %865 = vmatpush1.msra.mxu0 0.0
    %866 = vmatprep.subr.mxu0 %v447
    %867 = vmatpush1.msra.mxu0 %v447
    %868 = vmatprep.subr.mxu0 %v778
    %869 = vmatpush1.msra.mxu0 %v777
    %870 = vmatprep.subr.mxu0 %v757
    %871 = vmatpush1.msra.mxu0 %v756
    %872 = vmatprep.subr.mxu0 %v736
    %873 = vmatpush1.msra.mxu0 %v735
    %874 = vmatprep.subr.mxu0 %v715
    %875 = vmatpush1.msra.mxu0 %v714
    %876 = vmatprep.subr.mxu0 %v606
    %877 = vmatpush1.msra.mxu0 %v605
    %878 = vmatprep.subr.mxu0 %v694
    %879 = vmatpush1.msra.mxu0 %v693
    %880 = vmatprep.subr.mxu0 %v673
    %881 = vmatpush1.msra.mxu0 %v672
    %882 = vmatprep.subr.mxu0 %v652
    %883 = vmatpush1.msra.mxu0 %v651
    %884 = vmatprep.subr.mxu0 %v631
    %885 = vmatpush1.msra.mxu0 %v630
    %886 = vmatprep.subr.mxu0 0.0
    %887 = vmatpush2.msra.mxu0 0.0
    %888 = vmatprep.subr.mxu0 0.0
    %889 = vmatpush2.msra.mxu0 0.0
    %890 = vmatprep.subr.mxu0 0.0
    %891 = vmatpush2.msra.mxu0 0.0
    %892 = vmatprep.subr.mxu0 0.0
    %893 = vmatpush2.msra.mxu0 0.0
    %894 = vmatprep.subr.mxu0 0.0
    %895 = vmatpush2.msra.mxu0 0.0
    %896 = vmatprep.subr.mxu0 0.0
    %897 = vmatpush2.msra.mxu0 0.0
    %898 = vmatprep.subr.mxu0 0.0
    %899 = vmatpush2.msra.mxu0 0.0
    %900 = vmatprep.subr.mxu0 0.0
    %901 = vmatpush2.msra.mxu0 0.0
    %902 = vmatprep.subr.mxu0 0.0
    %903 = vmatpush2.msra.mxu0 0.0
    %904 = vmatprep.subr.mxu0 0.0
    %905 = vmatpush2.msra.mxu0 0.0
    %906 = vmatprep.subr.mxu0 0.0
    %907 = vmatpush2.msra.mxu0 0.0
    %908 = vmatprep.subr.mxu0 0.0
    %909 = vmatpush2.msra.mxu0 0.0
    %910 = vmatprep.subr.mxu0 0.0
    %911 = vmatpush2.msra.mxu0 0.0
    %912 = vmatprep.subr.mxu0 0.0
    %913 = vmatpush2.msra.mxu0 0.0
    %914 = vmatprep.subr.mxu0 0.0
    %915 = vmatpush2.msra.mxu0 0.0
    %916 = vmatprep.subr.mxu0 0.0
    %917 = vmatpush2.msra.mxu0 0.0
    %918 = vmatprep.mubr.f32.mxu0 0.0
    %919 = vmatmul.mubr.f32.gmra.mxu0 %v781
    %v920 = vpop.f32.mrf.mxu0
    %v921 = vadd.f32 0.0, %v920
    %v922 = vpop.f32.mrf.mxu0
    %v923 = vadd.f32 0.0, %v922
    %924 = vdwg.mxu0
    %v925 = vmax.f32 %v850, 0.0
    %v926 = vmax.f32 %v852, 0.0
    %v927 = vmax.f32 %v921, 0.0
    %v928 = vmax.f32 %v923, 0.0
    %v929 = vadd.f32 %v925, %v522
    %v930 = vadd.f32 %v926, %v524
    %v931 = vadd.f32 %v927, %v599
    %v932 = vadd.f32 %v928, %v601
    %937 = vrot.lane.b32.xlu0 %v929, 112
    %v938 = vpop.permute.xlu0 %937
    %939 = vrot.lane.b32.xlu0 %v930, 112
    %v940 = vpop.permute.xlu0 %939
    %941 = vrot.lane.b32.xlu0 %v931, 112
    %v942 = vpop.permute.xlu0 %941
    %943 = vrot.lane.b32.xlu0 %v932, 112
    %v944 = vpop.permute.xlu0 %943
    %v945 = vsel %vm354, %v938, %v940
    %v946 = vsel %vm354, %v940, %v942
    %v947 = vsel %vm354, %v942, %v944
    %v953 = vsel %vm354, %v944, %v938
    %v954 = vadd.f32 %v929, %v945
    %v955 = vadd.f32 %v930, %v946
    %v956 = vadd.f32 %v931, %v947
    %v957 = vadd.f32 %v932, %v953
    %v958 = vmul.f32 %v954, 0.5
    %v959 = vmul.f32 %v955, 0.5
    %v960 = vmul.f32 %v956, 0.5
    %v961 = vmul.f32 %v957, 0.5
    %962 = vst [vmem:[#allocation10] sm:$0xff] %v958
    %963 = vst [vmem:[#allocation10 + $0x8] sm:$0xff] %v959
    %964 = vst [vmem:[#allocation10 + $0x10] sm:$0xff] %v960
    %965 = vst [vmem:[#allocation10 + $0x18] sm:$0xff] %v961
    // Predicated region
    $region34: #{tpu_custom_call.1} parent=1 // pred_check
      _
    $region35: #{tpu_custom_call.1} parent=1 // pred_check_branch
      %967 = sbr.rel (0) target = $region37
    $region36: #{tpu_custom_call.1} parent=1 // pred_region
      %s969 = ssub.s32 512, 512
      %970 = vsyncadd [#allocation4], %s969
      %s972 = sshll.u32 [#allocation10], 4
      %s973 = int_to_ptr.vmem [resolvable:$true] %s972
      %975 = dma.vmem_to_hbm [thread:$0]  %s973, 512, %s4, [#allocation4]
    $region37: #{tpu_custom_call.1} parent=1 // pred_fallthru
      _
    // Predicated region
    $region38: #{tpu_custom_call.1} parent=1 // pred_check
      _
    $region39: #{tpu_custom_call.1} parent=1 // pred_check_branch
      %977 = sbr.rel (0) target = $region41
    $region40: #{tpu_custom_call.1} parent=1 // pred_region
      %978 = dma.done [#allocation4], 512
    $region41: #{tpu_custom_call.1} parent=1 // pred_fallthru
      _
    %979 = vsyncpa [#allocation3], 1
    %980 = vsyncpa [#allocation6], 1
    %981 = vsyncpa [#allocation9], 1
    %982 = vsyncpa [#allocation4], 1

</llo_original>
